<compile_context>
chip_gen: v7x
topology: tpu7x:2x2x1
jax: 0.10.0
libtpu: 0.0.40
codegen_flags: <defaults>
</compile_context>

<pallas_src>
import jax
import jax.numpy as jnp
import numpy as np
from jax.experimental import pallas as pl
from jax.experimental.pallas import tpu as pltpu

ROWS = 12        # torch: pre_loss.view(12, -1)
LANES = 128
STRIP = 1024     # lanes processed per inner strip (keeps temporaries in vregs)


def _round_up(x, m):
    return ((x + m - 1) // m) * m


def _cdiv(a, b):
    return (a + b - 1) // b


def _tpu_config():
    """Return (two_tensorcores_per_device, max_col_block) from device_kind."""
    kind = ""
    try:
        kind = jax.devices()[0].device_kind.lower()
    except Exception:
        pass
    one_tc = ("lite" in kind) or ("v5e" in kind) or ("v6e" in kind) \
        or ("v2" in kind) or ("v3" in kind)
    two_tc = (not one_tc) and any(t in kind for t in ("v4", "v5p", "v5", "7"))
    if "7" in kind:
        max_cb = 8192     # v7x: 64 MiB VMEM -> keep streaming buffers small
    else:
        max_cb = 16384    # v5e/v6e/v4/v5p: 128 MiB VMEM -> bigger blocks
    return two_tc, max_cb


def _lane_sum(x):
    # (R, w) -> (R, 128) per-lane partial sums via aligned static slices:
    # pure VPU vreg adds, no cross-lane (XLU) work.
    w = x.shape[1]
    acc = x[:, 0:LANES]
    for t in range(1, w // LANES):
        acc = acc + x[:, t * LANES:(t + 1) * LANES]
    return acc


# ----------------------------------------------------------------------------
# Pallas kernel: fused masked MSE (char + affinity) + per-row threshold stats
# ----------------------------------------------------------------------------
def _make_maploss_kernel(n, cb, n_inner, ragged):
    strips = []
    s0 = 0
    while s0 < cb:
        strips.append((s0, min(STRIP, cb - s0)))
        s0 += STRIP

    def kernel(lg_ref, la_ref, pg_ref, pa_ref, m_ref,
               lossg_ref, lossa_ref,
               pcg_ref, psg_ref, ncg_ref, nsg_ref,
               pca_ref, psa_ref, nca_ref, nsa_ref):
        p = pl.program_id(0)          # parallel (TensorCore) shard
        j = pl.program_id(1)          # inner streaming axis

        # stat accumulators are resident across j; init once per shard
        @pl.when(j == 0)
        def _init():
            for ref in (pcg_ref, psg_ref, ncg_ref, nsg_ref,
                        pca_ref, psa_ref, nca_ref, nsa_ref):
                ref[...] = jnp.zeros_like(ref)

        R = m_ref.shape[0]
        # intended (unclamped) first column of this block
        base = (p * n_inner + j) * cb

        zi = jnp.zeros((R, LANES), jnp.int32)
        zf = jnp.zeros((R, LANES), jnp.float32)
        acc = {"pcg": zi, "ncg": zi, "pca": zi, "nca": zi,
               "psg": zf, "nsg": zf, "psa": zf, "nsa": zf}

        for (s0, w) in strips:
            m = m_ref[:, s0:s0 + w].astype(jnp.float32)   # mask read ONCE/strip
            if ragged:
                col = base + s0 + jax.lax.broadcasted_iota(jnp.int32, (R, w), 1)
                valid = col < n
            else:
                valid = None

            def half(label_ref, pred_ref, loss_ref, kpc, kps, knc, kns):
                lab = label_ref[:, s0:s0 + w].astype(jnp.float32)
                d = pred_ref[:, s0:s0 + w].astype(jnp.float32) - lab
                loss = d * d * m                 # MSELoss(reduce=False) * mask
                pos = lab > 0.1                  # strict >, as in torch
                neg = lab < 0.1                  # strict <, as in torch
                if valid is not None:
                    loss = jnp.where(valid, loss, 0.0)
                    pos = jnp.logical_and(pos, valid)
                    neg = jnp.logical_and(neg, valid)
                loss_ref[:, s0:s0 + w] = loss.astype(loss_ref.dtype)
                acc[kpc] = acc[kpc] + _lane_sum(pos.astype(jnp.int32))
                acc[knc] = acc[knc] + _lane_sum(neg.astype(jnp.int32))
                acc[kps] = acc[kps] + _lane_sum(jnp.where(pos, loss, 0.0))
                acc[kns] = acc[kns] + _lane_sum(jnp.where(neg, loss, 0.0))

            half(lg_ref, pg_ref, lossg_ref, "pcg", "psg", "ncg", "nsg")
            half(la_ref, pa_ref, lossa_ref, "pca", "psa", "nca", "nsa")

        # one resident-accumulator RMW per stat per block
        pcg_ref[...] += acc["pcg"]; psg_ref[...] += acc["psg"]
        ncg_ref[...] += acc["ncg"]; nsg_ref[...] += acc["nsg"]
        pca_ref[...] += acc["pca"]; psa_ref[...] += acc["psa"]
        nca_ref[...] += acc["nca"]; nsa_ref[...] += acc["nsa"]

    return kernel


def _fused_mse_stats(lg, la, pg, pa, m, n):
    R = lg.shape[0]
    two_tc, max_cb = _tpu_config()
    target = 2 if two_tc else 1

    # Divisor-free block choice: big enough to amortize ~0.35us/step overhead,
    # small enough that (when 2 TCs exist) both shards get real work.
    cb = min(max_cb, _round_up(max(_cdiv(n, target), LANES), LANES))
    n_blocks = _cdiv(n, cb)
    p_split = min(target, n_blocks)
    n_inner = _cdiv(n_blocks, p_split)
    npad_out = p_split * n_inner * cb
    ragged = (npad_out != n)

    kernel = _make_maploss_kernel(n=n, cb=cb, n_inner=n_inner, ragged=ragged)

    # inputs: clamp extra blocks of the second shard onto the last real block
    # (their stats are iota-masked in-kernel, so nothing is double counted)
    in_map = lambda p, j: (0, jnp.minimum(p * n_inner + j, n_blocks - 1))
    loss_map = lambda p, j: (0, p * n_inner + j)
    stat_map = lambda p, j: (0, p)

    io_spec = pl.BlockSpec((R, cb), in_map)
    loss_spec = pl.BlockSpec((R, cb), loss_map)
    stat_spec = pl.BlockSpec((R, LANES), stat_map)

    loss_shape = jax.ShapeDtypeStruct((R, npad_out), jnp.float32)
    cnt_shape = jax.ShapeDtypeStruct((R, LANES * p_split), jnp.int32)
    sum_shape = jax.ShapeDtypeStruct((R, LANES * p_split), jnp.float32)

    # VMEM budget with the physical 16-sublane footprint of 12-row f32 tiles
    rpad = _round_up(R, 8)
    stream_bytes = sum(2 * rpad * cb * jnp.dtype(a.dtype).itemsize
                       for a in (lg, la, pg, pa, m))       # 5 input streams
    stream_bytes += 2 * 2 * rpad * cb * 4                  # 2 loss streams
    stat_bytes = 8 * 2 * rpad * LANES * 4
    vmem_bytes = int(stream_bytes + stat_bytes + (8 << 20))  # scratch headroom

    in_bytes = sum(a.size * jnp.dtype(a.dtype).itemsize for a in (lg, la, pg, pa, m))
    cost = pl.CostEstimate(flops=int(20 * R * n), transcendentals=0,
                           bytes_accessed=int(in_bytes + 2 * R * npad_out * 4))

    return pl.pallas_call(
        kernel,
        out_shape=(loss_shape, loss_shape,
                   cnt_shape, sum_shape, cnt_shape, sum_shape,
                   cnt_shape, sum_shape, cnt_shape, sum_shape),
        grid=(p_split, n_inner),
        in_specs=[io_spec] * 5,
        out_specs=(loss_spec, loss_spec,
                   stat_spec, stat_spec, stat_spec, stat_spec,
                   stat_spec, stat_spec, stat_spec, stat_spec),
        compiler_params=pltpu.CompilerParams(
            dimension_semantics=("parallel", "arbitrary"),
            vmem_limit_bytes=vmem_bytes),
        cost_estimate=cost,
    )(lg, la, pg, pa, m)


# ----------------------------------------------------------------------------
# JAX glue: the data-dependent part of single_image_loss (per-row, tiny)
# ----------------------------------------------------------------------------
def _row_losses(loss_pad, label2, pos_cnt, pos_sum, neg_cnt, neg_sum, n):
    loss = loss_pad[:, :n]                      # drop in-kernel-zeroed padding
    pos_cnt_f = pos_cnt.astype(jnp.float32)
    posi_loss = pos_sum / jnp.maximum(pos_cnt_f, 1.0)
    neg_mean = neg_sum / jnp.maximum(neg_cnt.astype(jnp.float32), 1.0)

    k = 3 * pos_cnt                             # int32 (ROWS,)
    # TODO(synk): at production map sizes replace these two O(N log N) row
    #             sorts with an in-kernel histogram / threshold-selection pass.
    neg_vals = jnp.where(label2 < 0.1, loss, -1.0)          # losses are >= 0
    sorted_neg = -jnp.sort(-neg_vals, axis=1)               # descending
    iota = jax.lax.broadcasted_iota(jnp.int32, sorted_neg.shape, 1)
    take = (iota < k[:, None]) & (sorted_neg >= 0.0)
    topk_mean = jnp.sum(jnp.where(take, sorted_neg, 0.0), axis=1) \
        / jnp.maximum(k, 1).astype(jnp.float32)
    nega_loss = jnp.where(neg_cnt < k, neg_mean, topk_mean)

    # fallback when the row has no positive pixels: mean of top-500 of the row
    # TODO(synk): torch's topk(row, 500) errors if the row has < 500 elements;
    #             we clamp k to the real row length for small synthetic shapes.
    k500 = min(500, n)
    sorted_all = -jnp.sort(-loss, axis=1)
    top500_mean = jnp.mean(sorted_all[:, :k500], axis=1)

    row = jnp.where(pos_cnt > 0, posi_loss + nega_loss, top500_mean)
    return jnp.sum(row)


@jax.jit
def maploss_forward(gh_label, gah_label, p_gh, p_gah, mask):
    total = gh_label.size
    assert total % ROWS == 0, "B*H*W must be divisible by 12 (torch .view(12,-1))"
    n = total // ROWS

    # Native dtypes are streamed as-is and upcast inside the kernel
    # (bf16 labels/preds and uint8 masks are supported to cut HBM traffic).
    lg = gh_label.reshape(ROWS, n)
    la = gah_label.reshape(ROWS, n)
    pg = p_gh.reshape(ROWS, n)
    pa = p_gah.reshape(ROWS, n)
    m = mask.reshape(ROWS, n)

    (loss_g, loss_a,
     pcg, psg, ncg, nsg,
     pca, psa, nca, nsa) = _fused_mse_stats(lg, la, pg, pa, m, n)

    red = lambda s: jnp.sum(s, axis=1)          # lane + shard reduction
    char_loss = _row_losses(loss_g, lg.astype(jnp.float32),
                            red(pcg), red(psg), red(ncg), red(nsg), n)
    affi_loss = _row_losses(loss_a, la.astype(jnp.float32),
                            red(pca), red(psa), red(nca), red(nsa), n)
    return char_loss / 12.0 + affi_loss / 12.0


# ----------------------------------------------------------------------------
# Pure-numpy reference faithful to the torch loops (verification only)
# ----------------------------------------------------------------------------
def _numpy_reference(gh, gah, pgh, pgah, mask):
    def sil(pre_loss, label):
        pre = np.asarray(pre_loss).reshape(12, -1)
        lab = np.asarray(label).reshape(12, -1)
        total = 0.0
        for i in range(12):
            pos = pre[i][lab[i] > 0.1]
            neg = pre[i][lab[i] < 0.1]
            if len(pos) != 0:
                total += pos.mean()
                if len(neg) < 3 * len(pos):
                    total += neg.mean() if len(neg) > 0 else 0.0
                else:
                    kk = 3 * len(pos)
                    total += np.sort(neg)[::-1][:kk].mean()
            else:
                kk = min(500, pre.shape[1])
                total += np.sort(pre[i])[::-1][:kk].mean()
        return total

    gh_np, gah_np = np.asarray(gh), np.asarray(gah)
    l1 = (np.asarray(pgh) - gh_np) ** 2 * np.asarray(mask)
    l2 = (np.asarray(pgah) - gah_np) ** 2 * np.asarray(mask)
    return sil(l1, gh_np) / 12.0 + sil(l2, gah_np) / 12.0


if __name__ == "__main__":
    key = jax.random.PRNGKey(0)

    def run_case(name, B, H, W, gh_scale=1.0, gah_scale=1.0, seed_offset=0):
        ks = jax.random.split(jax.random.fold_in(key, seed_offset), 5)
        gh = jax.random.uniform(ks[0], (B, H, W), jnp.float32) * gh_scale
        gah = jax.random.uniform(ks[1], (B, H, W), jnp.float32) * gah_scale
        pgh = jax.random.uniform(ks[2], (B, H, W), jnp.float32)
        pgah = jax.random.uniform(ks[3], (B, H, W), jnp.float32)
        msk = (jax.random.uniform(ks[4], (B, H, W), jnp.float32) > 0.2
               ).astype(jnp.float32)
        out = jax.block_until_ready(maploss_forward(gh, gah, pgh, pgah, msk))
        ref = _numpy_reference(gh, gah, pgh, pgah, msk)
        err = abs(float(out) - float(ref))
        assert err < 1e-3 + 1e-3 * abs(float(ref)), (name, float(out), float(ref))

    # 1) pos-heavy rows -> plain negative-mean branch (2*24*32 = 12 * 128)
    run_case("uniform", 2, 24, 32)
    # 2) scaled labels -> top-3k negative branch (char) and zero-positive
    #    top-500 fallback (affinity)
    run_case("branchy", 2, 24, 32, gh_scale=0.12, gah_scale=0.05, seed_offset=1)
    # 3) N = 7900 (not a multiple of 128) -> exercises divisor-free blocks,
    #    the in-kernel ragged-tail masking and (on 2-TC chips) the 2-way split
    run_case("large", 2, 200, 237, seed_offset=2)

    print("KERNEL_OK")
</pallas_src>

<mosaic_0001>
module attributes {stable_mosaic.version = 11 : i64} {
  func.func @kernel(%arg0: i32, %arg1: i32, %arg2: memref<12x128xf32, #tpu.memory_space<vmem>>, %arg3: memref<12x128xf32, #tpu.memory_space<vmem>>, %arg4: memref<12x128xf32, #tpu.memory_space<vmem>>, %arg5: memref<12x128xf32, #tpu.memory_space<vmem>>, %arg6: memref<12x128xf32, #tpu.memory_space<vmem>>, %arg7: memref<12x128xf32, #tpu.memory_space<vmem>>, %arg8: memref<12x128xf32, #tpu.memory_space<vmem>>, %arg9: memref<12x128xi32, #tpu.memory_space<vmem>>, %arg10: memref<12x128xf32, #tpu.memory_space<vmem>>, %arg11: memref<12x128xi32, #tpu.memory_space<vmem>>, %arg12: memref<12x128xf32, #tpu.memory_space<vmem>>, %arg13: memref<12x128xi32, #tpu.memory_space<vmem>>, %arg14: memref<12x128xf32, #tpu.memory_space<vmem>>, %arg15: memref<12x128xi32, #tpu.memory_space<vmem>>, %arg16: memref<12x128xf32, #tpu.memory_space<vmem>>) attributes {dimension_semantics = [#tpu.dimension_semantics<parallel>, #tpu.dimension_semantics<arbitrary>], iteration_bounds = array<i64: 1, 1>, scalar_prefetch = 0 : i64, scratch_operands = 0 : i64, tpu.core_type = #tpu.core_type<tc>, window_params = [{transform_indices = @transform_0, window_bounds = array<i64: 12, 128>}, {transform_indices = @transform_1, window_bounds = array<i64: 12, 128>}, {transform_indices = @transform_2, window_bounds = array<i64: 12, 128>}, {transform_indices = @transform_3, window_bounds = array<i64: 12, 128>}, {transform_indices = @transform_4, window_bounds = array<i64: 12, 128>}, {transform_indices = @transform_5, window_bounds = array<i64: 12, 128>}, {transform_indices = @transform_6, window_bounds = array<i64: 12, 128>}, {transform_indices = @transform_7, window_bounds = array<i64: 12, 128>}, {transform_indices = @transform_8, window_bounds = array<i64: 12, 128>}, {transform_indices = @transform_9, window_bounds = array<i64: 12, 128>}, {transform_indices = @transform_10, window_bounds = array<i64: 12, 128>}, {transform_indices = @transform_11, window_bounds = array<i64: 12, 128>}, {transform_indices = @transform_12, window_bounds = array<i64: 12, 128>}, {transform_indices = @transform_13, window_bounds = array<i64: 12, 128>}, {transform_indices = @transform_14, window_bounds = array<i64: 12, 128>}]} {
    %c0_i32 = arith.constant 0 : i32
    %0 = arith.cmpi eq, %arg1, %c0_i32 : i32
    %1 = arith.extui %0 : i1 to i32
    %c0_i32_0 = arith.constant 0 : i32
    %2 = arith.cmpi ne, %1, %c0_i32_0 : i32
    scf.if %2 {
      %c0_i32_55 = arith.constant 0 : i32
      %70 = vector.broadcast %c0_i32_55 : i32 to vector<12x128xi32>
      %c0_56 = arith.constant 0 : index
      %c0_57 = arith.constant 0 : index
      %71 = vector.load %arg9[%c0_56, %c0_57] : memref<12x128xi32, #tpu.memory_space<vmem>>, vector<12x128xi32>
      tpu.vector_store %arg9[%c0_56, %c0_57], %70 {strides = array<i32>} : memref<12x128xi32, #tpu.memory_space<vmem>>, vector<12x128xi32>,
      %cst_58 = arith.constant 0.000000e+00 : f32
      %72 = vector.broadcast %cst_58 : f32 to vector<12x128xf32>
      %c0_59 = arith.constant 0 : index
      %c0_60 = arith.constant 0 : index
      %73 = vector.load %arg10[%c0_59, %c0_60] : memref<12x128xf32, #tpu.memory_space<vmem>>, vector<12x128xf32>
      tpu.vector_store %arg10[%c0_59, %c0_60], %72 {strides = array<i32>} : memref<12x128xf32, #tpu.memory_space<vmem>>, vector<12x128xf32>,
      %c0_i32_61 = arith.constant 0 : i32
      %74 = vector.broadcast %c0_i32_61 : i32 to vector<12x128xi32>
      %c0_62 = arith.constant 0 : index
      %c0_63 = arith.constant 0 : index
      %75 = vector.load %arg11[%c0_62, %c0_63] : memref<12x128xi32, #tpu.memory_space<vmem>>, vector<12x128xi32>
      tpu.vector_store %arg11[%c0_62, %c0_63], %74 {strides = array<i32>} : memref<12x128xi32, #tpu.memory_space<vmem>>, vector<12x128xi32>,
      %cst_64 = arith.constant 0.000000e+00 : f32
      %76 = vector.broadcast %cst_64 : f32 to vector<12x128xf32>
      %c0_65 = arith.constant 0 : index
      %c0_66 = arith.constant 0 : index
      %77 = vector.load %arg12[%c0_65, %c0_66] : memref<12x128xf32, #tpu.memory_space<vmem>>, vector<12x128xf32>
      tpu.vector_store %arg12[%c0_65, %c0_66], %76 {strides = array<i32>} : memref<12x128xf32, #tpu.memory_space<vmem>>, vector<12x128xf32>,
      %c0_i32_67 = arith.constant 0 : i32
      %78 = vector.broadcast %c0_i32_67 : i32 to vector<12x128xi32>
      %c0_68 = arith.constant 0 : index
      %c0_69 = arith.constant 0 : index
      %79 = vector.load %arg13[%c0_68, %c0_69] : memref<12x128xi32, #tpu.memory_space<vmem>>, vector<12x128xi32>
      tpu.vector_store %arg13[%c0_68, %c0_69], %78 {strides = array<i32>} : memref<12x128xi32, #tpu.memory_space<vmem>>, vector<12x128xi32>,
      %cst_70 = arith.constant 0.000000e+00 : f32
      %80 = vector.broadcast %cst_70 : f32 to vector<12x128xf32>
      %c0_71 = arith.constant 0 : index
      %c0_72 = arith.constant 0 : index
      %81 = vector.load %arg14[%c0_71, %c0_72] : memref<12x128xf32, #tpu.memory_space<vmem>>, vector<12x128xf32>
      tpu.vector_store %arg14[%c0_71, %c0_72], %80 {strides = array<i32>} : memref<12x128xf32, #tpu.memory_space<vmem>>, vector<12x128xf32>,
      %c0_i32_73 = arith.constant 0 : i32
      %82 = vector.broadcast %c0_i32_73 : i32 to vector<12x128xi32>
      %c0_74 = arith.constant 0 : index
      %c0_75 = arith.constant 0 : index
      %83 = vector.load %arg15[%c0_74, %c0_75] : memref<12x128xi32, #tpu.memory_space<vmem>>, vector<12x128xi32>
      tpu.vector_store %arg15[%c0_74, %c0_75], %82 {strides = array<i32>} : memref<12x128xi32, #tpu.memory_space<vmem>>, vector<12x128xi32>,
      %cst_76 = arith.constant 0.000000e+00 : f32
      %84 = vector.broadcast %cst_76 : f32 to vector<12x128xf32>
      %c0_77 = arith.constant 0 : index
      %c0_78 = arith.constant 0 : index
      %85 = vector.load %arg16[%c0_77, %c0_78] : memref<12x128xf32, #tpu.memory_space<vmem>>, vector<12x128xf32>
      tpu.vector_store %arg16[%c0_77, %c0_78], %84 {strides = array<i32>} : memref<12x128xf32, #tpu.memory_space<vmem>>, vector<12x128xf32>,
    } else {
    }
    %c0_i32_1 = arith.constant 0 : i32
    %3 = vector.broadcast %c0_i32_1 : i32 to vector<12x128xi32>
    %cst = arith.constant 0.000000e+00 : f32
    %4 = vector.broadcast %cst : f32 to vector<12x128xf32>
    %c0 = arith.constant 0 : index
    %c0_2 = arith.constant 0 : index
    %5 = vector.load %arg6[%c0, %c0_2] : memref<12x128xf32, #tpu.memory_space<vmem>>, vector<12x128xf32>
    %c0_3 = arith.constant 0 : index
    %c0_4 = arith.constant 0 : index
    %6 = vector.load %arg2[%c0_3, %c0_4] : memref<12x128xf32, #tpu.memory_space<vmem>>, vector<12x128xf32>
    %c0_5 = arith.constant 0 : index
    %c0_6 = arith.constant 0 : index
    %7 = vector.load %arg4[%c0_5, %c0_6] : memref<12x128xf32, #tpu.memory_space<vmem>>, vector<12x128xf32>
    %8 = arith.subf %7, %6 : vector<12x128xf32>
    %9 = arith.mulf %8, %8 : vector<12x128xf32>
    %10 = arith.mulf %9, %5 : vector<12x128xf32>
    %cst_7 = arith.constant 1.000000e-01 : f32
    %11 = vector.broadcast %cst_7 : f32 to vector<12x128xf32>
    %12 = arith.cmpf ogt, %6, %11 : vector<12x128xf32>
    %cst_8 = arith.constant 1.000000e-01 : f32
    %13 = vector.broadcast %cst_8 : f32 to vector<12x128xf32>
    %14 = arith.cmpf olt, %6, %13 : vector<12x128xf32>
    %c0_9 = arith.constant 0 : index
    %c0_10 = arith.constant 0 : index
    %15 = vector.load %arg7[%c0_9, %c0_10] : memref<12x128xf32, #tpu.memory_space<vmem>>, vector<12x128xf32>
    tpu.vector_store %arg7[%c0_9, %c0_10], %10 {strides = array<i32>} : memref<12x128xf32, #tpu.memory_space<vmem>>, vector<12x128xf32>,
    %16 = arith.extui %12 : vector<12x128xi1> to vector<12x128xi32>
    %17 = arith.addi %3, %16 : vector<12x128xi32>
    %18 = arith.extui %14 : vector<12x128xi1> to vector<12x128xi32>
    %19 = arith.addi %3, %18 : vector<12x128xi32>
    %cst_11 = arith.constant 0.000000e+00 : f32
    %20 = vector.broadcast %cst_11 : f32 to vector<12x128xf32>
    %21 = arith.select %12, %10, %20 : vector<12x128xi1>, vector<12x128xf32>
    %22 = arith.addf %4, %21 : vector<12x128xf32>
    %cst_12 = arith.constant 0.000000e+00 : f32
    %23 = vector.broadcast %cst_12 : f32 to vector<12x128xf32>
    %24 = arith.select %14, %10, %23 : vector<12x128xi1>, vector<12x128xf32>
    %25 = arith.addf %4, %24 : vector<12x128xf32>
    %c0_13 = arith.constant 0 : index
    %c0_14 = arith.constant 0 : index
    %26 = vector.load %arg3[%c0_13, %c0_14] : memref<12x128xf32, #tpu.memory_space<vmem>>, vector<12x128xf32>
    %c0_15 = arith.constant 0 : index
    %c0_16 = arith.constant 0 : index
    %27 = vector.load %arg5[%c0_15, %c0_16] : memref<12x128xf32, #tpu.memory_space<vmem>>, vector<12x128xf32>
    %28 = arith.subf %27, %26 : vector<12x128xf32>
    %29 = arith.mulf %28, %28 : vector<12x128xf32>
    %30 = arith.mulf %29, %5 : vector<12x128xf32>
    %cst_17 = arith.constant 1.000000e-01 : f32
    %31 = vector.broadcast %cst_17 : f32 to vector<12x128xf32>
    %32 = arith.cmpf ogt, %26, %31 : vector<12x128xf32>
    %cst_18 = arith.constant 1.000000e-01 : f32
    %33 = vector.broadcast %cst_18 : f32 to vector<12x128xf32>
    %34 = arith.cmpf olt, %26, %33 : vector<12x128xf32>
    %c0_19 = arith.constant 0 : index
    %c0_20 = arith.constant 0 : index
    %35 = vector.load %arg8[%c0_19, %c0_20] : memref<12x128xf32, #tpu.memory_space<vmem>>, vector<12x128xf32>
    tpu.vector_store %arg8[%c0_19, %c0_20], %30 {strides = array<i32>} : memref<12x128xf32, #tpu.memory_space<vmem>>, vector<12x128xf32>,
    %36 = arith.extui %32 : vector<12x128xi1> to vector<12x128xi32>
    %37 = arith.addi %3, %36 : vector<12x128xi32>
    %38 = arith.extui %34 : vector<12x128xi1> to vector<12x128xi32>
    %39 = arith.addi %3, %38 : vector<12x128xi32>
    %cst_21 = arith.constant 0.000000e+00 : f32
    %40 = vector.broadcast %cst_21 : f32 to vector<12x128xf32>
    %41 = arith.select %32, %30, %40 : vector<12x128xi1>, vector<12x128xf32>
    %42 = arith.addf %4, %41 : vector<12x128xf32>
    %cst_22 = arith.constant 0.000000e+00 : f32
    %43 = vector.broadcast %cst_22 : f32 to vector<12x128xf32>
    %44 = arith.select %34, %30, %43 : vector<12x128xi1>, vector<12x128xf32>
    %45 = arith.addf %4, %44 : vector<12x128xf32>
    %c0_23 = arith.constant 0 : index
    %c0_24 = arith.constant 0 : index
    %46 = vector.load %arg9[%c0_23, %c0_24] : memref<12x128xi32, #tpu.memory_space<vmem>>, vector<12x128xi32>
    %47 = arith.addi %46, %17 : vector<12x128xi32>
    %c0_25 = arith.constant 0 : index
    %c0_26 = arith.constant 0 : index
    %48 = vector.load %arg9[%c0_25, %c0_26] : memref<12x128xi32, #tpu.memory_space<vmem>>, vector<12x128xi32>
    tpu.vector_store %arg9[%c0_25, %c0_26], %47 {strides = array<i32>} : memref<12x128xi32, #tpu.memory_space<vmem>>, vector<12x128xi32>,
    %c0_27 = arith.constant 0 : index
    %c0_28 = arith.constant 0 : index
    %49 = vector.load %arg10[%c0_27, %c0_28] : memref<12x128xf32, #tpu.memory_space<vmem>>, vector<12x128xf32>
    %50 = arith.addf %49, %22 : vector<12x128xf32>
    %c0_29 = arith.constant 0 : index
    %c0_30 = arith.constant 0 : index
    %51 = vector.load %arg10[%c0_29, %c0_30] : memref<12x128xf32, #tpu.memory_space<vmem>>, vector<12x128xf32>
    tpu.vector_store %arg10[%c0_29, %c0_30], %50 {strides = array<i32>} : memref<12x128xf32, #tpu.memory_space<vmem>>, vector<12x128xf32>,
    %c0_31 = arith.constant 0 : index
    %c0_32 = arith.constant 0 : index
    %52 = vector.load %arg11[%c0_31, %c0_32] : memref<12x128xi32, #tpu.memory_space<vmem>>, vector<12x128xi32>
    %53 = arith.addi %52, %19 : vector<12x128xi32>
    %c0_33 = arith.constant 0 : index
    %c0_34 = arith.constant 0 : index
    %54 = vector.load %arg11[%c0_33, %c0_34] : memref<12x128xi32, #tpu.memory_space<vmem>>, vector<12x128xi32>
    tpu.vector_store %arg11[%c0_33, %c0_34], %53 {strides = array<i32>} : memref<12x128xi32, #tpu.memory_space<vmem>>, vector<12x128xi32>,
    %c0_35 = arith.constant 0 : index
    %c0_36 = arith.constant 0 : index
    %55 = vector.load %arg12[%c0_35, %c0_36] : memref<12x128xf32, #tpu.memory_space<vmem>>, vector<12x128xf32>
    %56 = arith.addf %55, %25 : vector<12x128xf32>
    %c0_37 = arith.constant 0 : index
    %c0_38 = arith.constant 0 : index
    %57 = vector.load %arg12[%c0_37, %c0_38] : memref<12x128xf32, #tpu.memory_space<vmem>>, vector<12x128xf32>
    tpu.vector_store %arg12[%c0_37, %c0_38], %56 {strides = array<i32>} : memref<12x128xf32, #tpu.memory_space<vmem>>, vector<12x128xf32>,
    %c0_39 = arith.constant 0 : index
    %c0_40 = arith.constant 0 : index
    %58 = vector.load %arg13[%c0_39, %c0_40] : memref<12x128xi32, #tpu.memory_space<vmem>>, vector<12x128xi32>
    %59 = arith.addi %58, %37 : vector<12x128xi32>
    %c0_41 = arith.constant 0 : index
    %c0_42 = arith.constant 0 : index
    %60 = vector.load %arg13[%c0_41, %c0_42] : memref<12x128xi32, #tpu.memory_space<vmem>>, vector<12x128xi32>
    tpu.vector_store %arg13[%c0_41, %c0_42], %59 {strides = array<i32>} : memref<12x128xi32, #tpu.memory_space<vmem>>, vector<12x128xi32>,
    %c0_43 = arith.constant 0 : index
    %c0_44 = arith.constant 0 : index
    %61 = vector.load %arg14[%c0_43, %c0_44] : memref<12x128xf32, #tpu.memory_space<vmem>>, vector<12x128xf32>
    %62 = arith.addf %61, %42 : vector<12x128xf32>
    %c0_45 = arith.constant 0 : index
    %c0_46 = arith.constant 0 : index
    %63 = vector.load %arg14[%c0_45, %c0_46] : memref<12x128xf32, #tpu.memory_space<vmem>>, vector<12x128xf32>
    tpu.vector_store %arg14[%c0_45, %c0_46], %62 {strides = array<i32>} : memref<12x128xf32, #tpu.memory_space<vmem>>, vector<12x128xf32>,
    %c0_47 = arith.constant 0 : index
    %c0_48 = arith.constant 0 : index
    %64 = vector.load %arg15[%c0_47, %c0_48] : memref<12x128xi32, #tpu.memory_space<vmem>>, vector<12x128xi32>
    %65 = arith.addi %64, %39 : vector<12x128xi32>
    %c0_49 = arith.constant 0 : index
    %c0_50 = arith.constant 0 : index
    %66 = vector.load %arg15[%c0_49, %c0_50] : memref<12x128xi32, #tpu.memory_space<vmem>>, vector<12x128xi32>
    tpu.vector_store %arg15[%c0_49, %c0_50], %65 {strides = array<i32>} : memref<12x128xi32, #tpu.memory_space<vmem>>, vector<12x128xi32>,
    %c0_51 = arith.constant 0 : index
    %c0_52 = arith.constant 0 : index
    %67 = vector.load %arg16[%c0_51, %c0_52] : memref<12x128xf32, #tpu.memory_space<vmem>>, vector<12x128xf32>
    %68 = arith.addf %67, %45 : vector<12x128xf32>
    %c0_53 = arith.constant 0 : index
    %c0_54 = arith.constant 0 : index
    %69 = vector.load %arg16[%c0_53, %c0_54] : memref<12x128xf32, #tpu.memory_space<vmem>>, vector<12x128xf32>
    tpu.vector_store %arg16[%c0_53, %c0_54], %68 {strides = array<i32>} : memref<12x128xf32, #tpu.memory_space<vmem>>, vector<12x128xf32>,
    return
  }
  func.func @transform_0(%arg0: i32, %arg1: i32) -> (i32, i32) {
    %c1_i32 = arith.constant 1 : i32
    %0 = arith.muli %arg0, %c1_i32 : i32
    %1 = arith.addi %0, %arg1 : i32
    %c0_i32 = arith.constant 0 : i32
    %2 = arith.minsi %1, %c0_i32 : i32
    %c0_i32_0 = arith.constant 0 : i32
    %c0_i32_1 = arith.constant 0 : i32
    return %c0_i32_0, %2 : i32, i32
  }
  func.func @transform_1(%arg0: i32, %arg1: i32) -> (i32, i32) {
    %c1_i32 = arith.constant 1 : i32
    %0 = arith.muli %arg0, %c1_i32 : i32
    %1 = arith.addi %0, %arg1 : i32
    %c0_i32 = arith.constant 0 : i32
    %2 = arith.minsi %1, %c0_i32 : i32
    %c0_i32_0 = arith.constant 0 : i32
    %c0_i32_1 = arith.constant 0 : i32
    return %c0_i32_0, %2 : i32, i32
  }
  func.func @transform_2(%arg0: i32, %arg1: i32) -> (i32, i32) {
    %c1_i32 = arith.constant 1 : i32
    %0 = arith.muli %arg0, %c1_i32 : i32
    %1 = arith.addi %0, %arg1 : i32
    %c0_i32 = arith.constant 0 : i32
    %2 = arith.minsi %1, %c0_i32 : i32
    %c0_i32_0 = arith.constant 0 : i32
    %c0_i32_1 = arith.constant 0 : i32
    return %c0_i32_0, %2 : i32, i32
  }
  func.func @transform_3(%arg0: i32, %arg1: i32) -> (i32, i32) {
    %c1_i32 = arith.constant 1 : i32
    %0 = arith.muli %arg0, %c1_i32 : i32
    %1 = arith.addi %0, %arg1 : i32
    %c0_i32 = arith.constant 0 : i32
    %2 = arith.minsi %1, %c0_i32 : i32
    %c0_i32_0 = arith.constant 0 : i32
    %c0_i32_1 = arith.constant 0 : i32
    return %c0_i32_0, %2 : i32, i32
  }
  func.func @transform_4(%arg0: i32, %arg1: i32) -> (i32, i32) {
    %c1_i32 = arith.constant 1 : i32
    %0 = arith.muli %arg0, %c1_i32 : i32
    %1 = arith.addi %0, %arg1 : i32
    %c0_i32 = arith.constant 0 : i32
    %2 = arith.minsi %1, %c0_i32 : i32
    %c0_i32_0 = arith.constant 0 : i32
    %c0_i32_1 = arith.constant 0 : i32
    return %c0_i32_0, %2 : i32, i32
  }
  func.func @transform_5(%arg0: i32, %arg1: i32) -> (i32, i32) {
    %c1_i32 = arith.constant 1 : i32
    %0 = arith.muli %arg0, %c1_i32 : i32
    %1 = arith.addi %0, %arg1 : i32
    %c0_i32 = arith.constant 0 : i32
    %c0_i32_0 = arith.constant 0 : i32
    return %c0_i32, %1 : i32, i32
  }
  func.func @transform_6(%arg0: i32, %arg1: i32) -> (i32, i32) {
    %c1_i32 = arith.constant 1 : i32
    %0 = arith.muli %arg0, %c1_i32 : i32
    %1 = arith.addi %0, %arg1 : i32
    %c0_i32 = arith.constant 0 : i32
    %c0_i32_0 = arith.constant 0 : i32
    return %c0_i32, %1 : i32, i32
  }
  func.func @transform_7(%arg0: i32, %arg1: i32) -> (i32, i32) {
    %c0_i32 = arith.constant 0 : i32
    %c0_i32_0 = arith.constant 0 : i32
    return %c0_i32, %arg0 : i32, i32
  }
  func.func @transform_8(%arg0: i32, %arg1: i32) -> (i32, i32) {
    %c0_i32 = arith.constant 0 : i32
    %c0_i32_0 = arith.constant 0 : i32
    return %c0_i32, %arg0 : i32, i32
  }
  func.func @transform_9(%arg0: i32, %arg1: i32) -> (i32, i32) {
    %c0_i32 = arith.constant 0 : i32
    %c0_i32_0 = arith.constant 0 : i32
    return %c0_i32, %arg0 : i32, i32
  }
  func.func @transform_10(%arg0: i32, %arg1: i32) -> (i32, i32) {
    %c0_i32 = arith.constant 0 : i32
    %c0_i32_0 = arith.constant 0 : i32
    return %c0_i32, %arg0 : i32, i32
  }
  func.func @transform_11(%arg0: i32, %arg1: i32) -> (i32, i32) {
    %c0_i32 = arith.constant 0 : i32
    %c0_i32_0 = arith.constant 0 : i32
    return %c0_i32, %arg0 : i32, i32
  }
  func.func @transform_12(%arg0: i32, %arg1: i32) -> (i32, i32) {
    %c0_i32 = arith.constant 0 : i32
    %c0_i32_0 = arith.constant 0 : i32
    return %c0_i32, %arg0 : i32, i32
  }
  func.func @transform_13(%arg0: i32, %arg1: i32) -> (i32, i32) {
    %c0_i32 = arith.constant 0 : i32
    %c0_i32_0 = arith.constant 0 : i32
    return %c0_i32, %arg0 : i32, i32
  }
  func.func @transform_14(%arg0: i32, %arg1: i32) -> (i32, i32) {
    %c0_i32 = arith.constant 0 : i32
    %c0_i32_0 = arith.constant 0 : i32
    return %c0_i32, %arg0 : i32, i32
  }
}

</mosaic_0001>

<llo_original>
// kernel: maploss_forward.1
$region0: #{maploss_forward.1}
  #allocation0 [shape = 'u32[]', space=smem, size = 0x4, offset = 0x4, fixed_abs, tag = 'smem constant byte address 0x4 - core index']
  #allocation1 [shape = 'u32[144,128]{1,0:T(1,128)}', space=vmem, size = 0x12000, scoped, tag = 'internal scratch']
  %s0 = inlined_call_operand.vmem [shape: f32[12,128], index: 0, kind: input, shape index: {}]
  %s1 = inlined_call_operand.vmem [shape: f32[12,128], index: 1, kind: input, shape index: {}]
  %s2 = inlined_call_operand.vmem [shape: f32[12,128], index: 2, kind: input, shape index: {}]
  %s3 = inlined_call_operand.vmem [shape: f32[12,128], index: 3, kind: input, shape index: {}]
  %s4 = inlined_call_operand.vmem [shape: f32[12,128], index: 4, kind: input, shape index: {}]
  %s5 = inlined_call_operand.vmem [shape: f32[12,128], index: 5, kind: output, shape index: {0}]
  %s6 = inlined_call_operand.vmem [shape: f32[12,128], index: 6, kind: output, shape index: {1}]
  %s7 = inlined_call_operand.vmem [shape: s32[12,128], index: 7, kind: output, shape index: {2}]
  %s8 = inlined_call_operand.vmem [shape: f32[12,128], index: 8, kind: output, shape index: {3}]
  %s9 = inlined_call_operand.vmem [shape: s32[12,128], index: 9, kind: output, shape index: {4}]
  %s10 = inlined_call_operand.vmem [shape: f32[12,128], index: 10, kind: output, shape index: {5}]
  %s11 = inlined_call_operand.vmem [shape: s32[12,128], index: 11, kind: output, shape index: {6}]
  %s12 = inlined_call_operand.vmem [shape: f32[12,128], index: 12, kind: output, shape index: {7}]
  %s13 = inlined_call_operand.vmem [shape: s32[12,128], index: 13, kind: output, shape index: {8}]
  %s14 = inlined_call_operand.vmem [shape: f32[12,128], index: 14, kind: output, shape index: {9}]
  %15 = xla_tuple %s5, %s6, %s7, %s8, %s9, %s10, %s11, %s12, %s13, %s14
  %s16 = sld [smem:[#allocation0]]
  $region106: #{maploss_forward.1} parent=0
    _
  %s18 = ssub.s32 1, %s16
  %s19 = scalar_select 0, %s18, %s16
  // Predicated region
  $region2: #{maploss_forward.1} parent=0 // pred_check
    _
  $region3: #{maploss_forward.1} parent=0 // pred_check_branch
    %21 = sbr.rel (0) target = $region5
  $region4: #{maploss_forward.1} parent=0 // pred_region
    %s22 = sadd.s32 0, 0
    %p23 = scmp.lt.s32.totalorder %s22, 0
    %s24 = scalar_select %p23, %s22, 0
    %p25 = scmp.lt.s32.totalorder %s24, 0
    %s26 = scalar_select %p25, %s24, 0
    %s27 = smul.addr %s26, 8
    %s28 = scalar_lea.vmem %s0, %s27
    %s29 = sadd.s32 0, 0
    %p30 = scmp.lt.s32.totalorder %s29, 0
    %s31 = scalar_select %p30, %s29, 0
  $region5: #{maploss_forward.1} parent=0 // pred_fallthru
    _
  // Predicated region
  $region6: #{maploss_forward.1} parent=0 // pred_check
    _
  $region7: #{maploss_forward.1} parent=0 // pred_check_branch
    %33 = sbr.rel (0) target = $region9
  $region8: #{maploss_forward.1} parent=0 // pred_region
    %s34 = sadd.s32 0, 0
    %p35 = scmp.lt.s32.totalorder %s34, 0
    %s36 = scalar_select %p35, %s34, 0
    %p37 = scmp.lt.s32.totalorder %s36, 0
    %s38 = scalar_select %p37, %s36, 0
    %s39 = smul.addr %s38, 8
    %s40 = scalar_lea.vmem %s1, %s39
    %s41 = sadd.s32 0, 0
    %p42 = scmp.lt.s32.totalorder %s41, 0
    %s43 = scalar_select %p42, %s41, 0
  $region9: #{maploss_forward.1} parent=0 // pred_fallthru
    _
  // Predicated region
  $region10: #{maploss_forward.1} parent=0 // pred_check
    _
  $region11: #{maploss_forward.1} parent=0 // pred_check_branch
    %45 = sbr.rel (0) target = $region13
  $region12: #{maploss_forward.1} parent=0 // pred_region
    %s46 = sadd.s32 0, 0
    %p47 = scmp.lt.s32.totalorder %s46, 0
    %s48 = scalar_select %p47, %s46, 0
    %p49 = scmp.lt.s32.totalorder %s48, 0
    %s50 = scalar_select %p49, %s48, 0
    %s51 = smul.addr %s50, 8
    %s52 = scalar_lea.vmem %s2, %s51
    %s53 = sadd.s32 0, 0
    %p54 = scmp.lt.s32.totalorder %s53, 0
    %s55 = scalar_select %p54, %s53, 0
  $region13: #{maploss_forward.1} parent=0 // pred_fallthru
    _
  // Predicated region
  $region14: #{maploss_forward.1} parent=0 // pred_check
    _
  $region15: #{maploss_forward.1} parent=0 // pred_check_branch
    %57 = sbr.rel (0) target = $region17
  $region16: #{maploss_forward.1} parent=0 // pred_region
    %s58 = sadd.s32 0, 0
    %p59 = scmp.lt.s32.totalorder %s58, 0
    %s60 = scalar_select %p59, %s58, 0
    %p61 = scmp.lt.s32.totalorder %s60, 0
    %s62 = scalar_select %p61, %s60, 0
    %s63 = smul.addr %s62, 8
    %s64 = scalar_lea.vmem %s3, %s63
    %s65 = sadd.s32 0, 0
    %p66 = scmp.lt.s32.totalorder %s65, 0
    %s67 = scalar_select %p66, %s65, 0
  $region17: #{maploss_forward.1} parent=0 // pred_fallthru
    _
  // Predicated region
  $region18: #{maploss_forward.1} parent=0 // pred_check
    _
  $region19: #{maploss_forward.1} parent=0 // pred_check_branch
    %69 = sbr.rel (0) target = $region21
  $region20: #{maploss_forward.1} parent=0 // pred_region
    %s70 = sadd.s32 0, 0
    %p71 = scmp.lt.s32.totalorder %s70, 0
    %s72 = scalar_select %p71, %s70, 0
    %p73 = scmp.lt.s32.totalorder %s72, 0
    %s74 = scalar_select %p73, %s72, 0
    %s75 = smul.addr %s74, 8
    %s76 = scalar_lea.vmem %s4, %s75
    %s77 = sadd.s32 0, 0
    %p78 = scmp.lt.s32.totalorder %s77, 0
    %s79 = scalar_select %p78, %s77, 0
  $region21: #{maploss_forward.1} parent=0 // pred_fallthru
    _
  %s80 = sadd.s32 0, 0
  %p81 = scmp.lt.s32.totalorder %s80, 0
  %s82 = scalar_select %p81, %s80, 0
  %p83 = scmp.lt.s32.totalorder %s82, 0
  %s84 = scalar_select %p83, %s82, 0
  %s85 = smul.addr %s84, 8
  %s86 = scalar_lea.vmem %s0, %s85
  %s87 = sadd.s32 0, 0
  %p88 = scmp.lt.s32.totalorder %s87, 0
  %s89 = scalar_select %p88, %s87, 0
  %p90 = scmp.lt.s32.totalorder %s89, 0
  %s91 = scalar_select %p90, %s89, 0
  %s92 = smul.addr %s91, 8
  %s93 = scalar_lea.vmem %s1, %s92
  %s94 = sadd.s32 0, 0
  %p95 = scmp.lt.s32.totalorder %s94, 0
  %s96 = scalar_select %p95, %s94, 0
  %p97 = scmp.lt.s32.totalorder %s96, 0
  %s98 = scalar_select %p97, %s96, 0
  %s99 = smul.addr %s98, 8
  %s100 = scalar_lea.vmem %s2, %s99
  %s101 = sadd.s32 0, 0
  %p102 = scmp.lt.s32.totalorder %s101, 0
  %s103 = scalar_select %p102, %s101, 0
  %p104 = scmp.lt.s32.totalorder %s103, 0
  %s105 = scalar_select %p104, %s103, 0
  %s106 = smul.addr %s105, 8
  %s107 = scalar_lea.vmem %s3, %s106
  %s108 = sadd.s32 0, 0
  %p109 = scmp.lt.s32.totalorder %s108, 0
  %s110 = scalar_select %p109, %s108, 0
  %p111 = scmp.lt.s32.totalorder %s110, 0
  %s112 = scalar_select %p111, %s110, 0
  %s113 = smul.addr %s112, 8
  %s114 = scalar_lea.vmem %s4, %s113
  %s115 = sadd.s32 0, 0
  %p116 = scmp.lt.s32.totalorder %s115, 0
  %s117 = scalar_select %p116, %s115, 0
  %s118 = smul.addr %s117, 8
  %s119 = scalar_lea.vmem %s5, %s118
  %s120 = sadd.s32 0, 0
  %p121 = scmp.lt.s32.totalorder %s120, 0
  %s122 = scalar_select %p121, %s120, 0
  %s123 = smul.addr %s122, 8
  %s124 = scalar_lea.vmem %s6, %s123
  %s125 = sadd.s32 0, 0
  %p126 = scmp.lt.s32.totalorder %s125, 0
  %s127 = scalar_select %p126, %s125, 0
  %p128 = scmp.lt.s32.totalorder %s127, 0
  %s129 = scalar_select %p128, %s127, 0
  %s130 = smul.addr %s129, 8
  %s131 = scalar_lea.vmem %s0, %s130
  %s132 = sadd.s32 0, 0
  %p133 = scmp.lt.s32.totalorder %s132, 0
  %s134 = scalar_select %p133, %s132, 0
  %s135 = sadd.s32 0, 0
  %p136 = scmp.lt.s32.totalorder %s135, 0
  %s137 = scalar_select %p136, %s135, 0
  %p138 = scmp.lt.s32.totalorder %s137, 0
  %s139 = scalar_select %p138, %s137, 0
  %s140 = smul.addr %s139, 8
  %s141 = scalar_lea.vmem %s1, %s140
  %s142 = sadd.s32 0, 0
  %p143 = scmp.lt.s32.totalorder %s142, 0
  %s144 = scalar_select %p143, %s142, 0
  %s145 = sadd.s32 0, 0
  %p146 = scmp.lt.s32.totalorder %s145, 0
  %s147 = scalar_select %p146, %s145, 0
  %p148 = scmp.lt.s32.totalorder %s147, 0
  %s149 = scalar_select %p148, %s147, 0
  %s150 = smul.addr %s149, 8
  %s151 = scalar_lea.vmem %s2, %s150
  %s152 = sadd.s32 0, 0
  %p153 = scmp.lt.s32.totalorder %s152, 0
  %s154 = scalar_select %p153, %s152, 0
  %s155 = sadd.s32 0, 0
  %p156 = scmp.lt.s32.totalorder %s155, 0
  %s157 = scalar_select %p156, %s155, 0
  %p158 = scmp.lt.s32.totalorder %s157, 0
  %s159 = scalar_select %p158, %s157, 0
  %s160 = smul.addr %s159, 8
  %s161 = scalar_lea.vmem %s3, %s160
  %s162 = sadd.s32 0, 0
  %p163 = scmp.lt.s32.totalorder %s162, 0
  %s164 = scalar_select %p163, %s162, 0
  %s165 = sadd.s32 0, 0
  %p166 = scmp.lt.s32.totalorder %s165, 0
  %s167 = scalar_select %p166, %s165, 0
  %p168 = scmp.lt.s32.totalorder %s167, 0
  %s169 = scalar_select %p168, %s167, 0
  %s170 = smul.addr %s169, 8
  %s171 = scalar_lea.vmem %s4, %s170
  %s172 = sadd.s32 0, 0
  %p173 = scmp.lt.s32.totalorder %s172, 0
  %s174 = scalar_select %p173, %s172, 0
  %s175 = sadd.s32 0, 0
  %p176 = scmp.lt.s32.totalorder %s175, 0
  %s177 = scalar_select %p176, %s175, 0
  %s178 = smul.addr %s177, 8
  %s179 = scalar_lea.vmem %s5, %s178
  %s180 = sadd.s32 0, 0
  %s181 = sadd.s32 0, 0
  %p182 = scmp.lt.s32.totalorder %s181, 0
  %s183 = scalar_select %p182, %s181, 0
  %s184 = smul.addr %s183, 8
  %s185 = scalar_lea.vmem %s6, %s184
  %s186 = sadd.s32 0, 0
  %p187 = scmp.eq.s32.totalorder 0, 0
  // Predicated region
  $region22: #{maploss_forward.1} parent=0 // pred_check
    %p188 = pneg %p187
  $region23: #{maploss_forward.1} parent=0 // pred_check_branch
    %190 = sbr.rel (%p188) target = $region25
  $region24: #{maploss_forward.1} parent=0 // pred_region
    %191 = vst [vmem:[%s7] sm:$0xff] 0
    %192 = vst [vmem:[%s7 + $0x8] sm:$0xf] 0
    %193 = vst [vmem:[%s8] sm:$0xff] 0.0
    %194 = vst [vmem:[%s8 + $0x8] sm:$0xf] 0.0
    %195 = vst [vmem:[%s9] sm:$0xff] 0
    %196 = vst [vmem:[%s9 + $0x8] sm:$0xf] 0
    %197 = vst [vmem:[%s10] sm:$0xff] 0.0
    %198 = vst [vmem:[%s10 + $0x8] sm:$0xf] 0.0
    %199 = vst [vmem:[%s11] sm:$0xff] 0
    %200 = vst [vmem:[%s11 + $0x8] sm:$0xf] 0
    %201 = vst [vmem:[%s12] sm:$0xff] 0.0
    %202 = vst [vmem:[%s12 + $0x8] sm:$0xf] 0.0
    %203 = vst [vmem:[%s13] sm:$0xff] 0
    %204 = vst [vmem:[%s13 + $0x8] sm:$0xf] 0
    %205 = vst [vmem:[%s14] sm:$0xff] 0.0
    %206 = vst [vmem:[%s14 + $0x8] sm:$0xf] 0.0
  $region25: #{maploss_forward.1} parent=0 // pred_fallthru
    _
  %v207 = vld [vmem:[%s171] sm:$0xff]
  %v208 = vld [vmem:[%s171 + $0x8] sm:$0xf]
  %v209 = vld [vmem:[%s131] sm:$0xff]
  %v210 = vld [vmem:[%s131 + $0x8] sm:$0xf]
  %v211 = vld [vmem:[%s151] sm:$0xff]
  %v212 = vld [vmem:[%s151 + $0x8] sm:$0xf]
  %v213 = vsub.f32 %v211, %v209
  %v214 = vsub.f32 %v212, %v210
  %v215 = vmul.f32 %v213, %v213
  %v216 = vmul.f32 %v214, %v214
  %v217 = vmul.f32 %v215, %v207
  %v218 = vmul.f32 %v216, %v208
  %vm219 = vcmp.gt.f32.partialorder %v209, 0.1
  %vm220 = vcmp.gt.f32.partialorder %v210, 0.1
  %vm221 = vcmp.lt.f32.partialorder %v209, 0.1
  %vm222 = vcmp.lt.f32.partialorder %v210, 0.1
  %223 = vst [vmem:[%s179] sm:$0xff] %v217
  %224 = vst [vmem:[%s179 + $0x8] sm:$0xf] %v218
  %v225 = vsel %vm219, 1, 0
  %v226 = vsel %vm220, 1, 0
  %v227 = vsel %vm221, 1, 0
  %v228 = vsel %vm222, 1, 0
  %v229 = vsel %vm219, %v217, 0.0
  %v230 = vsel %vm220, %v218, 0.0
  %v231 = vadd.f32 %v229, 0.0
  %v232 = vadd.f32 %v230, 0.0
  %v233 = vsel %vm221, %v217, 0.0
  %v234 = vsel %vm222, %v218, 0.0
  %v235 = vadd.f32 %v233, 0.0
  %v236 = vadd.f32 %v234, 0.0
  %v237 = vld [vmem:[%s141] sm:$0xff]
  %v238 = vld [vmem:[%s141 + $0x8] sm:$0xf]
  %v239 = vld [vmem:[%s161] sm:$0xff]
  %v240 = vld [vmem:[%s161 + $0x8] sm:$0xf]
  %v241 = vsub.f32 %v239, %v237
  %v242 = vsub.f32 %v240, %v238
  %v243 = vmul.f32 %v241, %v241
  %v244 = vmul.f32 %v242, %v242
  %v245 = vmul.f32 %v243, %v207
  %v246 = vmul.f32 %v244, %v208
  %vm247 = vcmp.gt.f32.partialorder %v237, 0.1
  %vm248 = vcmp.gt.f32.partialorder %v238, 0.1
  %vm249 = vcmp.lt.f32.partialorder %v237, 0.1
  %vm250 = vcmp.lt.f32.partialorder %v238, 0.1
  %251 = vst [vmem:[%s185] sm:$0xff] %v245
  %252 = vst [vmem:[%s185 + $0x8] sm:$0xf] %v246
  %v253 = vsel %vm247, 1, 0
  %v254 = vsel %vm248, 1, 0
  %v255 = vsel %vm249, 1, 0
  %v256 = vsel %vm250, 1, 0
  %v257 = vsel %vm247, %v245, 0.0
  %v258 = vsel %vm248, %v246, 0.0
  %v259 = vadd.f32 %v257, 0.0
  %v260 = vadd.f32 %v258, 0.0
  %v261 = vsel %vm249, %v245, 0.0
  %v262 = vsel %vm250, %v246, 0.0
  %v263 = vadd.f32 %v261, 0.0
  %v264 = vadd.f32 %v262, 0.0
  %v265 = vld [vmem:[%s7] sm:$0xff]
  %v266 = vld [vmem:[%s7 + $0x8] sm:$0xf]
  %v267 = vadd.s32 %v265, %v225
  %v268 = vadd.s32 %v266, %v226
  %269 = vst [vmem:[%s7] sm:$0xff] %v267
  %270 = vst [vmem:[%s7 + $0x8] sm:$0xf] %v268
  %v271 = vld [vmem:[%s8] sm:$0xff]
  %v272 = vld [vmem:[%s8 + $0x8] sm:$0xf]
  %v273 = vadd.f32 %v271, %v231
  %v274 = vadd.f32 %v272, %v232
  %275 = vst [vmem:[%s8] sm:$0xff] %v273
  %276 = vst [vmem:[%s8 + $0x8] sm:$0xf] %v274
  %v277 = vld [vmem:[%s9] sm:$0xff]
  %v278 = vld [vmem:[%s9 + $0x8] sm:$0xf]
  %v279 = vadd.s32 %v277, %v227
  %v280 = vadd.s32 %v278, %v228
  %281 = vst [vmem:[%s9] sm:$0xff] %v279
  %282 = vst [vmem:[%s9 + $0x8] sm:$0xf] %v280
  %v283 = vld [vmem:[%s10] sm:$0xff]
  %v284 = vld [vmem:[%s10 + $0x8] sm:$0xf]
  %v285 = vadd.f32 %v283, %v235
  %v286 = vadd.f32 %v284, %v236
  %287 = vst [vmem:[%s10] sm:$0xff] %v285
  %288 = vst [vmem:[%s10 + $0x8] sm:$0xf] %v286
  %v289 = vld [vmem:[%s11] sm:$0xff]
  %v290 = vld [vmem:[%s11 + $0x8] sm:$0xf]
  %v291 = vadd.s32 %v289, %v253
  %v292 = vadd.s32 %v290, %v254
  %293 = vst [vmem:[%s11] sm:$0xff] %v291
  %294 = vst [vmem:[%s11 + $0x8] sm:$0xf] %v292
  %v295 = vld [vmem:[%s12] sm:$0xff]
  %v296 = vld [vmem:[%s12 + $0x8] sm:$0xf]
  %v297 = vadd.f32 %v295, %v259
  %v298 = vadd.f32 %v296, %v260
  %299 = vst [vmem:[%s12] sm:$0xff] %v297
  %300 = vst [vmem:[%s12 + $0x8] sm:$0xf] %v298
  %v301 = vld [vmem:[%s13] sm:$0xff]
  %v302 = vld [vmem:[%s13 + $0x8] sm:$0xf]
  %v303 = vadd.s32 %v301, %v255
  %v304 = vadd.s32 %v302, %v256
  %305 = vst [vmem:[%s13] sm:$0xff] %v303
  %306 = vst [vmem:[%s13 + $0x8] sm:$0xf] %v304
  %v307 = vld [vmem:[%s14] sm:$0xff]
  %v308 = vld [vmem:[%s14 + $0x8] sm:$0xf]
  %v309 = vadd.f32 %v307, %v263
  %v310 = vadd.f32 %v308, %v264
  %311 = vst [vmem:[%s14] sm:$0xff] %v309
  %312 = vst [vmem:[%s14 + $0x8] sm:$0xf] %v310
  %s313 = sadd.s32 0, 0
  %p314 = scmp.lt.s32.totalorder %s313, 0
  %s315 = scalar_select %p314, %s313, 0
  %s316 = smul.addr %s315, 8
  %s317 = scalar_lea.vmem %s5, %s316
  %s318 = sadd.s32 0, 0
  %p319 = scmp.lt.s32.totalorder %s318, 0
  %s320 = scalar_select %p319, %s318, 0
  %s321 = smul.addr %s320, 8
  %s322 = scalar_lea.vmem %s6, %s321
  // Predicated region
  $region26: #{maploss_forward.1} parent=0 // pred_check
    _
  $region27: #{maploss_forward.1} parent=0 // pred_check_branch
    %324 = sbr.rel (0) target = $region29
  $region28: #{maploss_forward.1} parent=0 // pred_region
    %s325 = sadd.s32 0, 0
  $region29: #{maploss_forward.1} parent=0 // pred_fallthru
    _
  // Predicated region
  $region30: #{maploss_forward.1} parent=0 // pred_check
    _
  $region31: #{maploss_forward.1} parent=0 // pred_check_branch
    %327 = sbr.rel (0) target = $region33
  $region32: #{maploss_forward.1} parent=0 // pred_region
    %s328 = sadd.s32 0, 0
  $region33: #{maploss_forward.1} parent=0 // pred_fallthru
    _
  // Predicated region
  $region34: #{maploss_forward.1} parent=0 // pred_check
    _
  $region35: #{maploss_forward.1} parent=0 // pred_check_branch
    %330 = sbr.rel (0) target = $region37
  $region36: #{maploss_forward.1} parent=0 // pred_region
    _
  $region37: #{maploss_forward.1} parent=0 // pred_fallthru
    _
  // Predicated region
  $region38: #{maploss_forward.1} parent=0 // pred_check
    _
  $region39: #{maploss_forward.1} parent=0 // pred_check_branch
    %332 = sbr.rel (0) target = $region41
  $region40: #{maploss_forward.1} parent=0 // pred_region
    _
  $region41: #{maploss_forward.1} parent=0 // pred_fallthru
    _
  // Predicated region
  $region42: #{maploss_forward.1} parent=0 // pred_check
    _
  $region43: #{maploss_forward.1} parent=0 // pred_check_branch
    %334 = sbr.rel (0) target = $region45
  $region44: #{maploss_forward.1} parent=0 // pred_region
    _
  $region45: #{maploss_forward.1} parent=0 // pred_fallthru
    _
  // Predicated region
  $region46: #{maploss_forward.1} parent=0 // pred_check
    _
  $region47: #{maploss_forward.1} parent=0 // pred_check_branch
    %336 = sbr.rel (0) target = $region49
  $region48: #{maploss_forward.1} parent=0 // pred_region
    _
  $region49: #{maploss_forward.1} parent=0 // pred_fallthru
    _
  // Predicated region
  $region50: #{maploss_forward.1} parent=0 // pred_check
    _
  $region51: #{maploss_forward.1} parent=0 // pred_check_branch
    %338 = sbr.rel (0) target = $region53
  $region52: #{maploss_forward.1} parent=0 // pred_region
    _
  $region53: #{maploss_forward.1} parent=0 // pred_fallthru
    _
  // Predicated region
  $region54: #{maploss_forward.1} parent=0 // pred_check
    _
  $region55: #{maploss_forward.1} parent=0 // pred_check_branch
    %340 = sbr.rel (0) target = $region57
  $region56: #{maploss_forward.1} parent=0 // pred_region
    _
  $region57: #{maploss_forward.1} parent=0 // pred_fallthru
    _
  // Predicated region
  $region58: #{maploss_forward.1} parent=0 // pred_check
    _
  $region59: #{maploss_forward.1} parent=0 // pred_check_branch
    %342 = sbr.rel (0) target = $region61
  $region60: #{maploss_forward.1} parent=0 // pred_region
    _
  $region61: #{maploss_forward.1} parent=0 // pred_fallthru
    _
  // Predicated region
  $region62: #{maploss_forward.1} parent=0 // pred_check
    _
  $region63: #{maploss_forward.1} parent=0 // pred_check_branch
    %344 = sbr.rel (0) target = $region65
  $region64: #{maploss_forward.1} parent=0 // pred_region
    _
  $region65: #{maploss_forward.1} parent=0 // pred_fallthru
    _
  // Predicated region
  $region66: #{maploss_forward.1} parent=0 // pred_check
    _
  $region67: #{maploss_forward.1} parent=0 // pred_check_branch
    %346 = sbr.rel (0) target = $region69
  $region68: #{maploss_forward.1} parent=0 // pred_region
    %s347 = sadd.s32 0, 0
    %p348 = scmp.lt.s32.totalorder %s347, 0
    %s349 = scalar_select %p348, %s347, 0
    %s350 = smul.addr %s349, 8
    %s351 = scalar_lea.vmem %s5, %s350
  $region69: #{maploss_forward.1} parent=0 // pred_fallthru
    _
  // Predicated region
  $region70: #{maploss_forward.1} parent=0 // pred_check
    _
  $region71: #{maploss_forward.1} parent=0 // pred_check_branch
    %353 = sbr.rel (0) target = $region73
  $region72: #{maploss_forward.1} parent=0 // pred_region
    %s354 = sadd.s32 0, 0
    %p355 = scmp.lt.s32.totalorder %s354, 0
    %s356 = scalar_select %p355, %s354, 0
    %s357 = smul.addr %s356, 8
    %s358 = scalar_lea.vmem %s6, %s357
  $region73: #{maploss_forward.1} parent=0 // pred_fallthru
    _
  // Predicated region
  $region74: #{maploss_forward.1} parent=0 // pred_check
    _
  $region75: #{maploss_forward.1} parent=0 // pred_check_branch
    %360 = sbr.rel (0) target = $region77
  $region76: #{maploss_forward.1} parent=0 // pred_region
    _
  $region77: #{maploss_forward.1} parent=0 // pred_fallthru
    _
  // Predicated region
  $region78: #{maploss_forward.1} parent=0 // pred_check
    _
  $region79: #{maploss_forward.1} parent=0 // pred_check_branch
    %362 = sbr.rel (0) target = $region81
  $region80: #{maploss_forward.1} parent=0 // pred_region
    _
  $region81: #{maploss_forward.1} parent=0 // pred_fallthru
    _
  // Predicated region
  $region82: #{maploss_forward.1} parent=0 // pred_check
    _
  $region83: #{maploss_forward.1} parent=0 // pred_check_branch
    %364 = sbr.rel (0) target = $region85
  $region84: #{maploss_forward.1} parent=0 // pred_region
    _
  $region85: #{maploss_forward.1} parent=0 // pred_fallthru
    _
  // Predicated region
  $region86: #{maploss_forward.1} parent=0 // pred_check
    _
  $region87: #{maploss_forward.1} parent=0 // pred_check_branch
    %366 = sbr.rel (0) target = $region89
  $region88: #{maploss_forward.1} parent=0 // pred_region
    _
  $region89: #{maploss_forward.1} parent=0 // pred_fallthru
    _
  // Predicated region
  $region90: #{maploss_forward.1} parent=0 // pred_check
    _
  $region91: #{maploss_forward.1} parent=0 // pred_check_branch
    %368 = sbr.rel (0) target = $region93
  $region92: #{maploss_forward.1} parent=0 // pred_region
    _
  $region93: #{maploss_forward.1} parent=0 // pred_fallthru
    _
  // Predicated region
  $region94: #{maploss_forward.1} parent=0 // pred_check
    _
  $region95: #{maploss_forward.1} parent=0 // pred_check_branch
    %370 = sbr.rel (0) target = $region97
  $region96: #{maploss_forward.1} parent=0 // pred_region
    _
  $region97: #{maploss_forward.1} parent=0 // pred_fallthru
    _
  // Predicated region
  $region98: #{maploss_forward.1} parent=0 // pred_check
    _
  $region99: #{maploss_forward.1} parent=0 // pred_check_branch
    %372 = sbr.rel (0) target = $region101
  $region100: #{maploss_forward.1} parent=0 // pred_region
    _
  $region101: #{maploss_forward.1} parent=0 // pred_fallthru
    _
  // Predicated region
  $region102: #{maploss_forward.1} parent=0 // pred_check
    _
  $region103: #{maploss_forward.1} parent=0 // pred_check_branch
    %374 = sbr.rel (0) target = $region105
  $region104: #{maploss_forward.1} parent=0 // pred_region
    _
  $region105: #{maploss_forward.1} parent=0 // pred_fallthru
    _

</llo_original>
